<compile_context>
chip_gen: v7x
topology: tpu7x:2x2x1
jax: 0.10.0
libtpu: 0.0.40
codegen_flags: <defaults>
</compile_context>

<pallas_src>
import jax
import jax.numpy as jnp
from jax.experimental import pallas as pl
from jax.experimental.pallas import tpu as pltpu


_LANE = 128
_MAX_TN = 8192  # lane-dense pixel tile cap (bf16 intermediates keep this <~16 MB live)


def _local_domain_classifier_kernel(x_ref, w1_ref, w2_ref, w3_ref, o_ref):
    """One (pixel-tile, batch) step of the fused 1x1-conv domain classifier.

    x_ref : (C_in, TN)  f32  input channels x pixel tile (pixels on lanes)
    w1_ref: (C1, C_in)  bf16 conv1 weight
    w2_ref: (C2, C1)    bf16 conv2 weight
    w3_ref: (C2, 1)     f32  conv3 weight as a column (VPU broadcast, no MXU)
    o_ref : (1, TN)     f32  sigmoid(domain logit) per pixel (lane-dense store)
    """
    # bf16 operands, f32 accumulation on the MXU.
    x = x_ref[...].astype(jnp.bfloat16)
    h1 = jnp.maximum(
        jnp.dot(w1_ref[...], x, preferred_element_type=jnp.float32), 0.0
    ).astype(jnp.bfloat16)
    h2 = jnp.maximum(
        jnp.dot(w2_ref[...], h1, preferred_element_type=jnp.float32), 0.0)
    # conv3 has a single output channel: a (1,C2)x(C2,TN) matmul would stream
    # the whole h2 through the MXU for one useful row.  Do it on the VPU/XLU
    # instead: broadcast-multiply by the (C2,1) weight column, sublane-reduce.
    logit = jnp.sum(w3_ref[...] * h2, axis=0, keepdims=True)
    o_ref[...] = jax.nn.sigmoid(logit).astype(o_ref.dtype)


@jax.jit
def local_domain_classifier(x, w1, w2, w3):
    """Fused forward of LocalDomainClassifier (context=False branch).

    x : (B, C_in, H, W) float32, NCHW
    w1: (C1, C_in)  = conv1.weight.reshape(C1, C_in)
    w2: (C2, C1)    = conv2.weight.reshape(C2, C1)
    w3: (1,  C2)    = conv3.weight.reshape(1, C2)
    returns (B, 1, H, W) = sigmoid(conv3(relu(conv2(relu(conv1(x))))))
    """
    b, c_in, h, w = x.shape
    c1 = w1.shape[0]
    c2 = w2.shape[0]
    p = h * w

    # Pure reshape (contiguous NCHW -> (B, C, P)); no HBM copy.
    x3 = x.reshape(b, c_in, p)

    # Lane-dense pixel tile: multiple of 128 lanes, big enough to amortize the
    # ~0.35us/step overhead, small enough that double-buffered x tiles plus
    # bf16/f32 intermediates stay far below v7x's 64 MiB physical VMEM.
    tn = min(_MAX_TN, pl.cdiv(p, _LANE) * _LANE)
    num_tiles = pl.cdiv(p, tn)  # last tile may be partial: Pallas masks OOB stores
    grid = (num_tiles, b)       # pixel tiles leading; both axes parallel for v7x

    # Tiny weights: pre-cast conv1/conv2 to bf16 for the MXU, reshape conv3 to
    # a (C2, 1) column for the in-kernel VPU broadcast (same data order).
    w1b = w1.astype(jnp.bfloat16)
    w2b = w2.astype(jnp.bfloat16)
    w3c = w3.reshape(c2, 1).astype(jnp.float32)

    out = pl.pallas_call(
        _local_domain_classifier_kernel,
        out_shape=jax.ShapeDtypeStruct((b, 1, p), x.dtype),
        grid=grid,
        in_specs=[
            # (batch, channel, pixel) -> kernel sees (C_in, TN)
            pl.BlockSpec((pl.Squeezed(), c_in, tn),
                         lambda ji, bi: (bi, 0, ji)),
            # Weights: index-invariant full blocks, stay resident in VMEM.
            pl.BlockSpec((c1, c_in), lambda ji, bi: (0, 0)),
            pl.BlockSpec((c2, c1), lambda ji, bi: (0, 0)),
            pl.BlockSpec((c2, 1), lambda ji, bi: (0, 0)),
        ],
        out_specs=pl.BlockSpec((pl.Squeezed(), 1, tn),
                               lambda ji, bi: (bi, 0, ji)),
        compiler_params=pltpu.CompilerParams(
            dimension_semantics=("parallel", "parallel"),
            vmem_limit_bytes=48 * 1024 * 1024,
        ),
    )(x3, w1b, w2b, w3c)

    return out.reshape(b, 1, h, w)


def local_domain_classifier_ref(x, w1, w2, w3):
    """Pure-JAX f32 reference mirroring the PyTorch forward (context=False)."""
    h1 = jax.nn.relu(jnp.einsum("oc,bchw->bohw", w1, x))
    h2 = jax.nn.relu(jnp.einsum("oc,bchw->bohw", w2, h1))
    logit = jnp.einsum("oc,bchw->bohw", w3, h2)
    return jax.nn.sigmoid(logit)


if __name__ == "__main__":
    key = jax.random.PRNGKey(0)
    kx, k1, k2, k3 = jax.random.split(key, 4)

    # Small demo shapes: batch=2, input_channels=64, spatial 16x16.
    batch, c_in, hgt, wid = 2, 64, 16, 16
    c1, c2 = 256, 128

    x = jax.random.normal(kx, (batch, c_in, hgt, wid), dtype=jnp.float32)
    # PyTorch _init_weights uses normal(0, 0.01); use a larger std here so the
    # demo exercises the relu/sigmoid non-trivially (forward math identical).
    w1 = 0.1 * jax.random.normal(k1, (c1, c_in), dtype=jnp.float32)
    w2 = 0.1 * jax.random.normal(k2, (c2, c1), dtype=jnp.float32)
    w3 = 0.1 * jax.random.normal(k3, (1, c2), dtype=jnp.float32)

    out = local_domain_classifier(x, w1, w2, w3)
    out = jax.block_until_ready(out)

    ref = local_domain_classifier_ref(x, w1, w2, w3)
    assert out.shape == (batch, 1, hgt, wid)
    # bf16 MXU operands with f32 accumulation: loosen tolerance accordingly.
    assert jnp.allclose(out, ref, atol=2e-2, rtol=2e-2), "mismatch vs reference"

    print("KERNEL_OK")
</pallas_src>

<mosaic_0001>
module attributes {stable_mosaic.version = 11 : i64} {
  func.func @_local_domain_classifier_kernel(%arg0: i32, %arg1: i32, %arg2: memref<1x64x256xf32, #tpu.memory_space<vmem>>, %arg3: memref<256x64xbf16, #tpu.memory_space<vmem>>, %arg4: memref<128x256xbf16, #tpu.memory_space<vmem>>, %arg5: memref<128x1xf32, #tpu.memory_space<vmem>>, %arg6: memref<1x1x256xf32, #tpu.memory_space<vmem>>) attributes {dimension_semantics = [#tpu.dimension_semantics<parallel>, #tpu.dimension_semantics<parallel>], iteration_bounds = array<i64: 1, 2>, scalar_prefetch = 0 : i64, scratch_operands = 0 : i64, tpu.core_type = #tpu.core_type<tc>, window_params = [{transform_indices = @transform_0, window_bounds = array<i64: 1, 64, 256>}, {pipeline_mode = #tpu.pipeline_mode<synchronous>, transform_indices = @transform_1, window_bounds = array<i64: 256, 64>}, {pipeline_mode = #tpu.pipeline_mode<synchronous>, transform_indices = @transform_2, window_bounds = array<i64: 128, 256>}, {pipeline_mode = #tpu.pipeline_mode<synchronous>, transform_indices = @transform_3, window_bounds = array<i64: 128, 1>}, {transform_indices = @transform_4, window_bounds = array<i64: 1, 1, 256>}]} {
    %c0 = arith.constant 0 : index
    %c0_0 = arith.constant 0 : index
    %c0_1 = arith.constant 0 : index
    %0 = vector.load %arg2[%c0, %c0_0, %c0_1] : memref<1x64x256xf32, #tpu.memory_space<vmem>>, vector<1x64x256xf32>
    %1 = vector.shape_cast %0 : vector<1x64x256xf32> to vector<64x256xf32>
    %2 = arith.truncf %1 : vector<64x256xf32> to vector<64x256xbf16>
    %c0_2 = arith.constant 0 : index
    %c0_3 = arith.constant 0 : index
    %3 = vector.load %arg3[%c0_2, %c0_3] : memref<256x64xbf16, #tpu.memory_space<vmem>>, vector<256x64xbf16>
    %cst = arith.constant dense<0.000000e+00> : vector<256x256xf32>
    %4 = tpu.matmul %3, %2, %cst {dimension_numbers = #tpu.dot_dimension_numbers<[1], [0], [0], [1], [0, 0, 1, 1], [], []>} : vector<256x64xbf16>, vector<64x256xbf16>, vector<256x256xf32> -> vector<256x256xf32>
    %cst_4 = arith.constant 0.000000e+00 : f32
    %5 = vector.broadcast %cst_4 : f32 to vector<256x256xf32>
    %6 = arith.maximumf %4, %5 : vector<256x256xf32>
    %7 = arith.truncf %6 : vector<256x256xf32> to vector<256x256xbf16>
    %c0_5 = arith.constant 0 : index
    %c0_6 = arith.constant 0 : index
    %8 = vector.load %arg4[%c0_5, %c0_6] : memref<128x256xbf16, #tpu.memory_space<vmem>>, vector<128x256xbf16>
    %cst_7 = arith.constant dense<0.000000e+00> : vector<128x256xf32>
    %9 = tpu.matmul %8, %7, %cst_7 {dimension_numbers = #tpu.dot_dimension_numbers<[1], [0], [0], [1], [0, 0, 1, 1], [], []>} : vector<128x256xbf16>, vector<256x256xbf16>, vector<128x256xf32> -> vector<128x256xf32>
    %cst_8 = arith.constant 0.000000e+00 : f32
    %10 = vector.broadcast %cst_8 : f32 to vector<128x256xf32>
    %11 = arith.maximumf %9, %10 : vector<128x256xf32>
    %c0_9 = arith.constant 0 : index
    %c0_10 = arith.constant 0 : index
    %12 = vector.load %arg5[%c0_9, %c0_10] : memref<128x1xf32, #tpu.memory_space<vmem>>, vector<128x1xf32>
    %13 = vector.broadcast %12 : vector<128x1xf32> to vector<128x256xf32>
    %14 = arith.mulf %13, %11 : vector<128x256xf32>
    %cst_11 = arith.constant dense<0.000000e+00> : vector<256xf32>
    %15 = vector.multi_reduction <add>, %14, %cst_11 [0] : vector<128x256xf32> to vector<256xf32>
    %16 = vector.shape_cast %15 : vector<256xf32> to vector<1x256xf32>
    %17 = arith.negf %16 : vector<1x256xf32>
    %18 = math.exp %17 : vector<1x256xf32>
    %cst_12 = arith.constant 1.000000e+00 : f32
    %19 = vector.broadcast %cst_12 : f32 to vector<1x256xf32>
    %20 = arith.addf %19, %18 : vector<1x256xf32>
    %21 = arith.divf %19, %20 : vector<1x256xf32>
    %c0_13 = arith.constant 0 : index
    %c0_14 = arith.constant 0 : index
    %c0_15 = arith.constant 0 : index
    %22 = vector.load %arg6[%c0_13, %c0_14, %c0_15] : memref<1x1x256xf32, #tpu.memory_space<vmem>>, vector<1x1x256xf32>
    %23 = vector.shape_cast %22 : vector<1x1x256xf32> to vector<1x256xf32>
    %24 = vector.shape_cast %21 : vector<1x256xf32> to vector<1x1x256xf32>
    tpu.vector_store %arg6[%c0_13, %c0_14, %c0_15], %24 {strides = array<i32>} : memref<1x1x256xf32, #tpu.memory_space<vmem>>, vector<1x1x256xf32>,
    return
  }
  func.func @transform_0(%arg0: i32, %arg1: i32) -> (i32, i32, i32) {
    %c0_i32 = arith.constant 0 : i32
    %c0_i32_0 = arith.constant 0 : i32
    return %arg1, %c0_i32, %arg0 : i32, i32, i32
  }
  func.func @transform_1(%arg0: i32, %arg1: i32) -> (i32, i32) {
    %c0_i32 = arith.constant 0 : i32
    %c0_i32_0 = arith.constant 0 : i32
    %c0_i32_1 = arith.constant 0 : i32
    return %c0_i32, %c0_i32_0 : i32, i32
  }
  func.func @transform_2(%arg0: i32, %arg1: i32) -> (i32, i32) {
    %c0_i32 = arith.constant 0 : i32
    %c0_i32_0 = arith.constant 0 : i32
    %c0_i32_1 = arith.constant 0 : i32
    return %c0_i32, %c0_i32_0 : i32, i32
  }
  func.func @transform_3(%arg0: i32, %arg1: i32) -> (i32, i32) {
    %c0_i32 = arith.constant 0 : i32
    %c0_i32_0 = arith.constant 0 : i32
    %c0_i32_1 = arith.constant 0 : i32
    return %c0_i32, %c0_i32_0 : i32, i32
  }
  func.func @transform_4(%arg0: i32, %arg1: i32) -> (i32, i32, i32) {
    %c0_i32 = arith.constant 0 : i32
    %c0_i32_0 = arith.constant 0 : i32
    return %arg1, %c0_i32, %arg0 : i32, i32, i32
  }
}

</mosaic_0001>

<llo_original>
// kernel: local_domain_classifier.1
$region0: #{local_domain_classifier.1}
  #allocation0 [shape = 'u32[]', space=smem, size = 0x4, offset = 0x4, fixed_abs, tag = 'smem constant byte address 0x4 - core index']
  #allocation1 [shape = 'u32[144,128]{1,0:T(1,128)}', space=vmem, size = 0x12000, scoped, tag = 'internal scratch']
  %s0 = inlined_call_operand.vmem [shape: f32[2,64,256], index: 0, kind: input, shape index: {}]
  %s1 = inlined_call_operand.vmem [shape: bf16[256,64], index: 1, kind: input, shape index: {}]
  %s2 = inlined_call_operand.vmem [shape: bf16[128,256], index: 2, kind: input, shape index: {}]
  %s3 = inlined_call_operand.vmem [shape: f32[128,1], index: 3, kind: input, shape index: {}]
  %s4 = inlined_call_operand.vmem [shape: f32[2,1,256], index: 4, kind: output, shape index: {}]
  %s5 = sld [smem:[#allocation0]]
  $region49: #{local_domain_classifier.1} parent=0
    _
  %s7 = ssub.s32 1, %s5
  %s8 = scalar_select 0, %s7, %s5
  loop: start=0, step=1, limit=4
  $region2: #{local_domain_classifier.1} parent=0 // loop_pre_header
    _
  $region3: #{local_domain_classifier.1} parent=0 // loop_header
    %s10 = sphi 0, %s14
    %p11 = scmp.ge.s32.totalorder %s10, 4
    %s17 = sphi 0, %s29
    %s18 = sphi 0, %s25
    %s19 = sphi 0, %s17
    %s20 = sphi 0, %s18
    %s21 = sphi 0, %s19
    %s22 = sphi 0, %s20
    %s34 = sphi 0, %s36
    %s37 = sphi 0, %s34
    %s38 = sphi 0, %s37
    %s54 = sphi 0, %s38
    %s58 = sphi 0, %s58
    %s60 = sphi 0, %s58
    %s61 = sphi 0, %s60
    %s75 = sphi 0, %s61
    %s79 = sphi 0, %s79
    %s81 = sphi 0, %s79
    %s82 = sphi 0, %s81
    %s96 = sphi 0, %s82
    %s100 = sphi 0, %s100
    %s102 = sphi 0, %s100
    %s103 = sphi 0, %s102
    %s117 = sphi 0, %s103
    %s125 = sphi 0, %s127
    %s128 = sphi 0, %s125
    %s129 = sphi 0, %s128
    %s145 = sphi 0, %s129
  $region4: #{local_domain_classifier.1} parent=0 // loop_header_branch
    %13 = sbr.rel (%p11) target = $region8
  $region5: #{local_domain_classifier.1} parent=0 // loop_body
    %s15 = ssub.s32 %s10, 1
    %s16 = ssub.s32 %s10, 2
    %s23 = sadd.s32 1, %s18
    %p24 = scmp.ge.s32.totalorder %s23, 2
    %s25 = scalar_select %p24, 0, %s23
    %s26 = sadd.s32 1, %s17
    %s27 = scalar_select %p24, %s26, %s17
    %p28 = scmp.ge.s32.totalorder %s27, 1
    %s29 = scalar_select %p28, 0, %s27
    %s30 = ssub.s32 %s18, %s25
    %s31 = ssub.s32 %s17, %s29
    %s32 = sor.u32 %s30, %s31
    %p33 = scmp.eq.s32.totalorder %s32, 0
    %s35 = sadd.s32 %s34, 1
    %s36 = scalar_select %p33, %s34, %s35
    %p39 = pneg %p33
    %p40 = scmp.eq.s32.totalorder %s10, 1
    %p41 = por %p39, %p40
    %p42 = scmp.ne.s32.totalorder %s34, %s37
    %p43 = scmp.eq.s32.totalorder %s10, 0
    %p44 = por %p42, %p43
    %p45 = scmp.ne.s32.totalorder %s34, %s37
    %p46 = scmp.eq.s32.totalorder %s15, 1
    %p47 = por %p45, %p46
    %p48 = scmp.ne.s32.totalorder %s37, %s38
    %p49 = scmp.eq.s32.totalorder %s15, 0
    %p50 = por %p48, %p49
    %p51 = scmp.ne.s32.totalorder %s37, %s38
    %p52 = scmp.eq.s32.totalorder %s16, 1
    %p53 = por %p51, %p52
    %p55 = scmp.ne.s32.totalorder %s38, %s54
    %p56 = scmp.eq.s32.totalorder %s16, 0
    %p57 = por %p55, %p56
    %s59 = sadd.s32 %s58, 1
    %p62 = scmp.eq.s32.totalorder %s10, 1
    %p63 = scmp.ne.s32.totalorder %s58, %s60
    %p64 = scmp.eq.s32.totalorder %s10, 0
    %p65 = por %p63, %p64
    %p66 = scmp.ne.s32.totalorder %s58, %s60
    %p67 = scmp.eq.s32.totalorder %s15, 1
    %p68 = por %p66, %p67
    %p69 = scmp.ne.s32.totalorder %s60, %s61
    %p70 = scmp.eq.s32.totalorder %s15, 0
    %p71 = por %p69, %p70
    %p72 = scmp.ne.s32.totalorder %s60, %s61
    %p73 = scmp.eq.s32.totalorder %s16, 1
    %p74 = por %p72, %p73
    %p76 = scmp.ne.s32.totalorder %s61, %s75
    %p77 = scmp.eq.s32.totalorder %s16, 0
    %p78 = por %p76, %p77
    %s80 = sadd.s32 %s79, 1
    %p83 = scmp.eq.s32.totalorder %s10, 1
    %p84 = scmp.ne.s32.totalorder %s79, %s81
    %p85 = scmp.eq.s32.totalorder %s10, 0
    %p86 = por %p84, %p85
    %p87 = scmp.ne.s32.totalorder %s79, %s81
    %p88 = scmp.eq.s32.totalorder %s15, 1
    %p89 = por %p87, %p88
    %p90 = scmp.ne.s32.totalorder %s81, %s82
    %p91 = scmp.eq.s32.totalorder %s15, 0
    %p92 = por %p90, %p91
    %p93 = scmp.ne.s32.totalorder %s81, %s82
    %p94 = scmp.eq.s32.totalorder %s16, 1
    %p95 = por %p93, %p94
    %p97 = scmp.ne.s32.totalorder %s82, %s96
    %p98 = scmp.eq.s32.totalorder %s16, 0
    %p99 = por %p97, %p98
    %s101 = sadd.s32 %s100, 1
    %p104 = scmp.eq.s32.totalorder %s10, 1
    %p105 = scmp.ne.s32.totalorder %s100, %s102
    %p106 = scmp.eq.s32.totalorder %s10, 0
    %p107 = por %p105, %p106
    %p108 = scmp.ne.s32.totalorder %s100, %s102
    %p109 = scmp.eq.s32.totalorder %s15, 1
    %p110 = por %p108, %p109
    %p111 = scmp.ne.s32.totalorder %s102, %s103
    %p112 = scmp.eq.s32.totalorder %s15, 0
    %p113 = por %p111, %p112
    %p114 = scmp.ne.s32.totalorder %s102, %s103
    %p115 = scmp.eq.s32.totalorder %s16, 1
    %p116 = por %p114, %p115
    %p118 = scmp.ne.s32.totalorder %s103, %s117
    %p119 = scmp.eq.s32.totalorder %s16, 0
    %p120 = por %p118, %p119
    %s121 = ssub.s32 %s18, %s25
    %s122 = ssub.s32 %s17, %s29
    %s123 = sor.u32 %s121, %s122
    %p124 = scmp.eq.s32.totalorder %s123, 0
    %s126 = sadd.s32 %s125, 1
    %s127 = scalar_select %p124, %s125, %s126
    %p130 = pneg %p124
    %p131 = scmp.eq.s32.totalorder %s10, 1
    %p132 = por %p130, %p131
    %p133 = scmp.ne.s32.totalorder %s125, %s128
    %p134 = scmp.eq.s32.totalorder %s10, 0
    %p135 = por %p133, %p134
    %p136 = scmp.ne.s32.totalorder %s125, %s128
    %p137 = scmp.eq.s32.totalorder %s15, 1
    %p138 = por %p136, %p137
    %p139 = scmp.ne.s32.totalorder %s128, %s129
    %p140 = scmp.eq.s32.totalorder %s15, 0
    %p141 = por %p139, %p140
    %p142 = scmp.ne.s32.totalorder %s128, %s129
    %p143 = scmp.eq.s32.totalorder %s16, 1
    %p144 = por %p142, %p143
    %p146 = scmp.ne.s32.totalorder %s129, %s145
    %p147 = scmp.eq.s32.totalorder %s16, 0
    %p148 = por %p146, %p147
    %p149 = scmp.le.s32.totalorder 1, %s10
    %p150 = scmp.lt.s32.totalorder %s10, 3
    %p151 = pnand %p149, %p150
    %p152 = pneg %p151
    // Predicated region
    $region9: #{local_domain_classifier.1} parent=5 // pred_check
      _
    $region10: #{local_domain_classifier.1} parent=5 // pred_check_branch
      %154 = sbr.rel (%p151) target = $region12
    $region11: #{local_domain_classifier.1} parent=5 // pred_region
      %s155 = ssub.s32 %s10, 1
      // Predicated region
      $region13: #{local_domain_classifier.1} parent=11 // pred_check
        %p156 = pneg %p71
      $region14: #{local_domain_classifier.1} parent=11 // pred_check_branch
        %158 = sbr.rel (%p156) target = $region16
      $region15: #{local_domain_classifier.1} parent=11 // pred_region
        _
      $region16: #{local_domain_classifier.1} parent=11 // pred_fallthru
        _
      // Predicated region
      $region17: #{local_domain_classifier.1} parent=11 // pred_check
        %p159 = pneg %p92
      $region18: #{local_domain_classifier.1} parent=11 // pred_check_branch
        %161 = sbr.rel (%p159) target = $region20
      $region19: #{local_domain_classifier.1} parent=11 // pred_region
        _
      $region20: #{local_domain_classifier.1} parent=11 // pred_fallthru
        _
      // Predicated region
      $region21: #{local_domain_classifier.1} parent=11 // pred_check
        %p162 = pneg %p113
      $region22: #{local_domain_classifier.1} parent=11 // pred_check_branch
        %164 = sbr.rel (%p162) target = $region24
      $region23: #{local_domain_classifier.1} parent=11 // pred_region
        _
      $region24: #{local_domain_classifier.1} parent=11 // pred_fallthru
        _
    $region12: #{local_domain_classifier.1} parent=5 // pred_fallthru
      _
    %p165 = scmp.lt.s32.totalorder %s10, 2
    // Predicated region
    $region25: #{local_domain_classifier.1} parent=5 // pred_check
      %p166 = pneg %p165
    $region26: #{local_domain_classifier.1} parent=5 // pred_check_branch
      %168 = sbr.rel (%p166) target = $region28
    $region27: #{local_domain_classifier.1} parent=5 // pred_region
      // Predicated region
      $region29: #{local_domain_classifier.1} parent=27 // pred_check
        %p169 = pneg %p44
      $region30: #{local_domain_classifier.1} parent=27 // pred_check_branch
        %171 = sbr.rel (%p169) target = $region32
      $region31: #{local_domain_classifier.1} parent=27 // pred_region
        %s172 = smul.u32 2, %s17
        %p173 = scmp.lt.s32.totalorder %s18, 1
        %s174 = scalar_select %p173, %s18, 1
        %p175 = scmp.lt.s32.totalorder %s172, 1
        %s176 = scalar_select %p175, %s172, 1
        %s177 = smul.addr %s174, 16
        %s178 = sadd.s32 %s176, %s177
        %s179 = smul.addr %s178, 8
        %s180 = scalar_lea.vmem %s0, %s179
        %s181 = smul.u32 2, %s17
      $region32: #{local_domain_classifier.1} parent=27 // pred_fallthru
        _
    $region28: #{local_domain_classifier.1} parent=5 // pred_fallthru
      _
    %p182 = scmp.le.s32.totalorder 1, %s10
    %p183 = scmp.lt.s32.totalorder %s10, 3
    %p184 = pnand %p182, %p183
    %p185 = pneg %p184
    // Predicated region
    $region33: #{local_domain_classifier.1} parent=5 // pred_check
      _
    $region34: #{local_domain_classifier.1} parent=5 // pred_check_branch
      %187 = sbr.rel (%p184) target = $region36
    $region35: #{local_domain_classifier.1} parent=5 // pred_region
      %s188 = ssub.s32 %s10, 1
      %s189 = smul.u32 2, %s19
      %p190 = scmp.lt.s32.totalorder %s20, 1
      %s191 = scalar_select %p190, %s20, 1
      %p192 = scmp.lt.s32.totalorder %s189, 1
      %s193 = scalar_select %p192, %s189, 1
      %s194 = smul.addr %s191, 16
      %s195 = sadd.s32 %s193, %s194
      %s196 = smul.addr %s195, 8
      %s197 = scalar_lea.vmem %s0, %s196
      %p198 = pneg %p50
      %p199 = pneg %p47
      %p200 = pneg %p71
      %p201 = pneg %p68
      %p202 = pneg %p92
      %p203 = pneg %p89
      %p204 = pneg %p113
      %p205 = pneg %p110
      %p206 = pneg %p141
      %p207 = pneg %p138
      %s208 = smul.u32 2, %s19
      %p209 = scmp.lt.s32.totalorder %s20, 1
      %s210 = scalar_select %p209, %s20, 1
      %p211 = scmp.lt.s32.totalorder %s208, 1
      %s212 = scalar_select %p211, %s208, 1
      %s213 = smul.addr %s210, 2
      %s214 = sadd.s32 %s212, %s213
      %s215 = scalar_lea.vmem %s4, %s214
      %s216 = smul.u32 2, %s19
      %p217 = scmp.lt.s32.totalorder %s20, 1
      %s218 = scalar_select %p217, %s20, 1
      %p219 = scmp.lt.s32.totalorder %s216, 1
      %s220 = scalar_select %p219, %s216, 1
      %s221 = smul.addr %s218, 16
      %s222 = sadd.s32 %s220, %s221
      %s223 = smul.addr %s222, 8
      %s224 = scalar_lea.vmem %s0, %s223
      %s225 = smul.u32 2, %s19
      %s226 = smul.u32 2, %s19
      %p227 = scmp.lt.s32.totalorder %s20, 1
      %s228 = scalar_select %p227, %s20, 1
      %p229 = scmp.lt.s32.totalorder %s226, 1
      %s230 = scalar_select %p229, %s226, 1
      %s231 = smul.addr %s228, 2
      %s232 = sadd.s32 %s230, %s231
      %s233 = scalar_lea.vmem %s4, %s232
      %s234 = smul.u32 2, %s19
      %v236 = vld [vmem:[%s224] sm:$0xff]
      %v237 = vld [vmem:[%s224 + $0x8] sm:$0xff]
      %v238 = vld [vmem:[%s224 + $0x10] sm:$0xff]
      %v239 = vld [vmem:[%s224 + $0x18] sm:$0xff]
      %v240 = vld [vmem:[%s224 + $0x20] sm:$0xff]
      %v241 = vld [vmem:[%s224 + $0x28] sm:$0xff]
      %v242 = vld [vmem:[%s224 + $0x30] sm:$0xff]
      %v243 = vld [vmem:[%s224 + $0x38] sm:$0xff]
      %v244 = vld [vmem:[%s224 + $0x40] sm:$0xff]
      %v245 = vld [vmem:[%s224 + $0x48] sm:$0xff]
      %v246 = vld [vmem:[%s224 + $0x50] sm:$0xff]
      %v247 = vld [vmem:[%s224 + $0x58] sm:$0xff]
      %v248 = vld [vmem:[%s224 + $0x60] sm:$0xff]
      %v249 = vld [vmem:[%s224 + $0x68] sm:$0xff]
      %v250 = vld [vmem:[%s224 + $0x70] sm:$0xff]
      %v251 = vld [vmem:[%s224 + $0x78] sm:$0xff]
      %v252 = vpack.c.bf16 %v238, %v236
      %v253 = vpack.c.bf16 %v239, %v237
      %v254 = vpack.c.bf16 %v242, %v240
      %v255 = vpack.c.bf16 %v243, %v241
      %v256 = vpack.c.bf16 %v246, %v244
      %v257 = vpack.c.bf16 %v247, %v245
      %v258 = vpack.c.bf16 %v250, %v248
      %v259 = vpack.c.bf16 %v251, %v249
      %v260 = vld [vmem:[%s1] sm:$0xf]
      %v261 = vld [vmem:[%s1 + $0x4] sm:$0xf]
      %v262 = vld [vmem:[%s1 + $0x8] sm:$0xf]
      %v263 = vld [vmem:[%s1 + $0xc] sm:$0xf]
      %v264 = vld [vmem:[%s1 + $0x10] sm:$0xf]
      %v265 = vld [vmem:[%s1 + $0x14] sm:$0xf]
      %v266 = vld [vmem:[%s1 + $0x18] sm:$0xf]
      %v267 = vld [vmem:[%s1 + $0x1c] sm:$0xf]
      %v268 = vld [vmem:[%s1 + $0x20] sm:$0xf]
      %v269 = vld [vmem:[%s1 + $0x24] sm:$0xf]
      %v270 = vld [vmem:[%s1 + $0x28] sm:$0xf]
      %v271 = vld [vmem:[%s1 + $0x2c] sm:$0xf]
      %v272 = vld [vmem:[%s1 + $0x30] sm:$0xf]
      %v273 = vld [vmem:[%s1 + $0x34] sm:$0xf]
      %v274 = vld [vmem:[%s1 + $0x38] sm:$0xf]
      %v275 = vld [vmem:[%s1 + $0x3c] sm:$0xf]
      %v276 = vld [vmem:[%s1 + $0x40] sm:$0xf]
      %v277 = vld [vmem:[%s1 + $0x44] sm:$0xf]
      %v278 = vld [vmem:[%s1 + $0x48] sm:$0xf]
      %v279 = vld [vmem:[%s1 + $0x4c] sm:$0xf]
      %v280 = vld [vmem:[%s1 + $0x50] sm:$0xf]
      %v281 = vld [vmem:[%s1 + $0x54] sm:$0xf]
      %v282 = vld [vmem:[%s1 + $0x58] sm:$0xf]
      %v283 = vld [vmem:[%s1 + $0x5c] sm:$0xf]
      %v284 = vld [vmem:[%s1 + $0x60] sm:$0xf]
      %v285 = vld [vmem:[%s1 + $0x64] sm:$0xf]
      %v286 = vld [vmem:[%s1 + $0x68] sm:$0xf]
      %v287 = vld [vmem:[%s1 + $0x6c] sm:$0xf]
      %v288 = vld [vmem:[%s1 + $0x70] sm:$0xf]
      %v289 = vld [vmem:[%s1 + $0x74] sm:$0xf]
      %v290 = vld [vmem:[%s1 + $0x78] sm:$0xf]
      %v291 = vld [vmem:[%s1 + $0x7c] sm:$0xf]
      %v324 = vunpack.c.l.b16 %v260
      %v325 = vunpack.c.l.b16 %v261
      %v326 = vunpack.c.l.b16 %v262
      %v327 = vunpack.c.l.b16 %v263
      %v328 = vunpack.c.l.b16 %v264
      %v329 = vunpack.c.l.b16 %v265
      %v330 = vunpack.c.l.b16 %v266
      %v331 = vunpack.c.l.b16 %v267
      %v332 = vunpack.c.l.b16 %v268
      %v333 = vunpack.c.l.b16 %v269
      %v334 = vunpack.c.l.b16 %v270
      %v335 = vunpack.c.l.b16 %v271
      %v336 = vunpack.c.l.b16 %v272
      %v337 = vunpack.c.l.b16 %v273
      %v338 = vunpack.c.l.b16 %v274
      %v339 = vunpack.c.l.b16 %v275
      %v340 = vunpack.c.l.b16 %v276
      %v341 = vunpack.c.l.b16 %v277
      %v342 = vunpack.c.l.b16 %v278
      %v343 = vunpack.c.l.b16 %v279
      %v344 = vunpack.c.l.b16 %v280
      %v345 = vunpack.c.l.b16 %v281
      %v346 = vunpack.c.l.b16 %v282
      %v347 = vunpack.c.l.b16 %v283
      %v348 = vunpack.c.l.b16 %v284
      %v349 = vunpack.c.l.b16 %v285
      %v350 = vunpack.c.l.b16 %v286
      %v351 = vunpack.c.l.b16 %v287
      %v352 = vunpack.c.l.b16 %v288
      %v353 = vunpack.c.l.b16 %v289
      %v354 = vunpack.c.l.b16 %v290
      %v355 = vunpack.c.l.b16 %v291
      %v356 = vpack.c.b16 %v325, %v324
      %v357 = vpack.c.b16 %v327, %v326
      %v358 = vpack.c.b16 %v329, %v328
      %v359 = vpack.c.b16 %v331, %v330
      %v360 = vpack.c.b16 %v333, %v332
      %v361 = vpack.c.b16 %v335, %v334
      %v362 = vpack.c.b16 %v337, %v336
      %v363 = vpack.c.b16 %v339, %v338
      %v364 = vpack.c.b16 %v341, %v340
      %v365 = vpack.c.b16 %v343, %v342
      %v366 = vpack.c.b16 %v345, %v344
      %v367 = vpack.c.b16 %v347, %v346
      %v368 = vpack.c.b16 %v349, %v348
      %v369 = vpack.c.b16 %v351, %v350
      %v370 = vpack.c.b16 %v353, %v352
      %v371 = vpack.c.b16 %v355, %v354
      %vm372 = vcmask 523264
      %v374 = vsel %vm372, %v356, 0
      %v377 = vsel %vm372, %v357, 0
      %v380 = vsel %vm372, %v358, 0
      %v383 = vsel %vm372, %v359, 0
      %v386 = vsel %vm372, %v360, 0
      %v389 = vsel %vm372, %v361, 0
      %v392 = vsel %vm372, %v362, 0
      %v395 = vsel %vm372, %v363, 0
      %v398 = vsel %vm372, %v364, 0
      %v401 = vsel %vm372, %v365, 0
      %v404 = vsel %vm372, %v366, 0
      %v407 = vsel %vm372, %v367, 0
      %v410 = vsel %vm372, %v368, 0
      %v413 = vsel %vm372, %v369, 0
      %v416 = vsel %vm372, %v370, 0
      %v419 = vsel %vm372, %v371, 0
      %421 = vmatprep.subr.bf16.mxu0 %v253
      %422 = vmatpush1.bf16.msra.mxu0 %v252
      %423 = vmatprep.subr.bf16.mxu0 %v255
      %424 = vmatpush1.bf16.msra.mxu0 %v254
      %425 = vmatprep.subr.bf16.mxu0 %v257
      %426 = vmatpush1.bf16.msra.mxu0 %v256
      %427 = vmatprep.subr.bf16.mxu0 %v259
      %428 = vmatpush1.bf16.msra.mxu0 %v258
      %429 = vmatprep.subr.bf16.mxu0 0
      %430 = vmatpush1.bf16.msra.mxu0 0
      %431 = vmatprep.subr.bf16.mxu0 0
      %432 = vmatpush1.bf16.msra.mxu0 0
      %433 = vmatprep.subr.bf16.mxu0 0
      %434 = vmatpush1.bf16.msra.mxu0 0
      %435 = vmatprep.subr.bf16.mxu0 0
      %436 = vmatpush1.bf16.msra.mxu0 0
      %437 = vmatprep.subr.bf16.mxu0 0
      %438 = vmatpush1.bf16.msra.mxu0 0
      %439 = vmatprep.subr.bf16.mxu0 0
      %440 = vmatpush1.bf16.msra.mxu0 0
      %441 = vmatprep.subr.bf16.mxu0 0
      %442 = vmatpush1.bf16.msra.mxu0 0
      %443 = vmatprep.subr.bf16.mxu0 0
      %444 = vmatpush1.bf16.msra.mxu0 0
      %445 = vmatprep.subr.bf16.mxu0 0
      %446 = vmatpush1.bf16.msra.mxu0 0
      %447 = vmatprep.subr.bf16.mxu0 0
      %448 = vmatpush1.bf16.msra.mxu0 0
      %449 = vmatprep.subr.bf16.mxu0 0
      %450 = vmatpush1.bf16.msra.mxu0 0
      %451 = vmatprep.subr.bf16.mxu0 0
      %452 = vmatpush1.bf16.msra.mxu0 0
      %453 = vmatprep.mubr.bf16.mxu0 0
      %454 = vmatmul.mubr.bf16.gmra.mrb[0].mxu0 %v374
      %v455 = vpop.f32.mrb[0].mxu0
      %v456 = vadd.f32 0.0, %v455
      %v457 = vpop.f32.mrb[0].mxu0
      %v458 = vadd.f32 0.0, %v457
      %v459 = vpop.f32.mrb[0].mxu0
      %v460 = vadd.f32 0.0, %v459
      %v461 = vpop.f32.mrb[0].mxu0
      %v462 = vadd.f32 0.0, %v461
      %463 = vmatprep.mubr.bf16.mxu0 0
      %464 = vmatmul.mubr.bf16.gmra.mrb[0].mxu0 %v377
      %v465 = vpop.f32.mrb[0].mxu0
      %v466 = vadd.f32 0.0, %v465
      %v467 = vpop.f32.mrb[0].mxu0
      %v468 = vadd.f32 0.0, %v467
      %v469 = vpop.f32.mrb[0].mxu0
      %v470 = vadd.f32 0.0, %v469
      %v471 = vpop.f32.mrb[0].mxu0
      %v472 = vadd.f32 0.0, %v471
      %473 = vmatprep.mubr.bf16.mxu0 0
      %474 = vmatmul.mubr.bf16.gmra.mrb[0].mxu0 %v380
      %v475 = vpop.f32.mrb[0].mxu0
      %v476 = vadd.f32 0.0, %v475
      %v477 = vpop.f32.mrb[0].mxu0
      %v478 = vadd.f32 0.0, %v477
      %v479 = vpop.f32.mrb[0].mxu0
      %v480 = vadd.f32 0.0, %v479
      %v481 = vpop.f32.mrb[0].mxu0
      %v482 = vadd.f32 0.0, %v481
      %483 = vmatprep.mubr.bf16.mxu0 0
      %484 = vmatmul.mubr.bf16.gmra.mrb[0].mxu0 %v383
      %v485 = vpop.f32.mrb[0].mxu0
      %v486 = vadd.f32 0.0, %v485
      %v487 = vpop.f32.mrb[0].mxu0
      %v488 = vadd.f32 0.0, %v487
      %v489 = vpop.f32.mrb[0].mxu0
      %v490 = vadd.f32 0.0, %v489
      %v491 = vpop.f32.mrb[0].mxu0
      %v492 = vadd.f32 0.0, %v491
      %493 = vmatprep.mubr.bf16.mxu0 0
      %494 = vmatmul.mubr.bf16.gmra.mrb[0].mxu0 %v386
      %v495 = vpop.f32.mrb[0].mxu0
      %v496 = vadd.f32 0.0, %v495
      %v497 = vpop.f32.mrb[0].mxu0
      %v498 = vadd.f32 0.0, %v497
      %v499 = vpop.f32.mrb[0].mxu0
      %v500 = vadd.f32 0.0, %v499
      %v501 = vpop.f32.mrb[0].mxu0
      %v502 = vadd.f32 0.0, %v501
      %503 = vmatprep.mubr.bf16.mxu0 0
      %504 = vmatmul.mubr.bf16.gmra.mrb[0].mxu0 %v389
      %v505 = vpop.f32.mrb[0].mxu0
      %v506 = vadd.f32 0.0, %v505
      %v507 = vpop.f32.mrb[0].mxu0
      %v508 = vadd.f32 0.0, %v507
      %v509 = vpop.f32.mrb[0].mxu0
      %v510 = vadd.f32 0.0, %v509
      %v511 = vpop.f32.mrb[0].mxu0
      %v512 = vadd.f32 0.0, %v511
      %513 = vmatprep.mubr.bf16.mxu0 0
      %514 = vmatmul.mubr.bf16.gmra.mrb[0].mxu0 %v392
      %v515 = vpop.f32.mrb[0].mxu0
      %v516 = vadd.f32 0.0, %v515
      %v517 = vpop.f32.mrb[0].mxu0
      %v518 = vadd.f32 0.0, %v517
      %v519 = vpop.f32.mrb[0].mxu0
      %v520 = vadd.f32 0.0, %v519
      %v521 = vpop.f32.mrb[0].mxu0
      %v522 = vadd.f32 0.0, %v521
      %523 = vmatprep.mubr.bf16.mxu0 0
      %524 = vmatmul.mubr.bf16.gmra.mrb[0].mxu0 %v395
      %v525 = vpop.f32.mrb[0].mxu0
      %v526 = vadd.f32 0.0, %v525
      %v527 = vpop.f32.mrb[0].mxu0
      %v528 = vadd.f32 0.0, %v527
      %v529 = vpop.f32.mrb[0].mxu0
      %v530 = vadd.f32 0.0, %v529
      %v531 = vpop.f32.mrb[0].mxu0
      %v532 = vadd.f32 0.0, %v531
      %533 = vmatprep.mubr.bf16.mxu0 0
      %534 = vmatmul.mubr.bf16.gmra.mrb[0].mxu0 %v398
      %v535 = vpop.f32.mrb[0].mxu0
      %v536 = vadd.f32 0.0, %v535
      %v537 = vpop.f32.mrb[0].mxu0
      %v538 = vadd.f32 0.0, %v537
      %v539 = vpop.f32.mrb[0].mxu0
      %v540 = vadd.f32 0.0, %v539
      %v541 = vpop.f32.mrb[0].mxu0
      %v542 = vadd.f32 0.0, %v541
      %543 = vmatprep.mubr.bf16.mxu0 0
      %544 = vmatmul.mubr.bf16.gmra.mrb[0].mxu0 %v401
      %v545 = vpop.f32.mrb[0].mxu0
      %v546 = vadd.f32 0.0, %v545
      %v547 = vpop.f32.mrb[0].mxu0
      %v548 = vadd.f32 0.0, %v547
      %v549 = vpop.f32.mrb[0].mxu0
      %v550 = vadd.f32 0.0, %v549
      %v551 = vpop.f32.mrb[0].mxu0
      %v552 = vadd.f32 0.0, %v551
      %553 = vmatprep.mubr.bf16.mxu0 0
      %554 = vmatmul.mubr.bf16.gmra.mrb[0].mxu0 %v404
      %v555 = vpop.f32.mrb[0].mxu0
      %v556 = vadd.f32 0.0, %v555
      %v557 = vpop.f32.mrb[0].mxu0
      %v558 = vadd.f32 0.0, %v557
      %v559 = vpop.f32.mrb[0].mxu0
      %v560 = vadd.f32 0.0, %v559
      %v561 = vpop.f32.mrb[0].mxu0
      %v562 = vadd.f32 0.0, %v561
      %563 = vmatprep.mubr.bf16.mxu0 0
      %564 = vmatmul.mubr.bf16.gmra.mrb[0].mxu0 %v407
      %v565 = vpop.f32.mrb[0].mxu0
      %v566 = vadd.f32 0.0, %v565
      %v567 = vpop.f32.mrb[0].mxu0
      %v568 = vadd.f32 0.0, %v567
      %v569 = vpop.f32.mrb[0].mxu0
      %v570 = vadd.f32 0.0, %v569
      %v571 = vpop.f32.mrb[0].mxu0
      %v572 = vadd.f32 0.0, %v571
      %573 = vmatprep.mubr.bf16.mxu0 0
      %574 = vmatmul.mubr.bf16.gmra.mrb[0].mxu0 %v410
      %v575 = vpop.f32.mrb[0].mxu0
      %v576 = vadd.f32 0.0, %v575
      %v577 = vpop.f32.mrb[0].mxu0
      %v578 = vadd.f32 0.0, %v577
      %v579 = vpop.f32.mrb[0].mxu0
      %v580 = vadd.f32 0.0, %v579
      %v581 = vpop.f32.mrb[0].mxu0
      %v582 = vadd.f32 0.0, %v581
      %583 = vmatprep.mubr.bf16.mxu0 0
      %584 = vmatmul.mubr.bf16.gmra.mrb[0].mxu0 %v413
      %v585 = vpop.f32.mrb[0].mxu0
      %v586 = vadd.f32 0.0, %v585
      %v587 = vpop.f32.mrb[0].mxu0
      %v588 = vadd.f32 0.0, %v587
      %v589 = vpop.f32.mrb[0].mxu0
      %v590 = vadd.f32 0.0, %v589
      %v591 = vpop.f32.mrb[0].mxu0
      %v592 = vadd.f32 0.0, %v591
      %593 = vmatprep.mubr.bf16.mxu0 0
      %594 = vmatmul.mubr.bf16.gmra.mrb[0].mxu0 %v416
      %v595 = vpop.f32.mrb[0].mxu0
      %v596 = vadd.f32 0.0, %v595
      %v597 = vpop.f32.mrb[0].mxu0
      %v598 = vadd.f32 0.0, %v597
      %v599 = vpop.f32.mrb[0].mxu0
      %v600 = vadd.f32 0.0, %v599
      %v601 = vpop.f32.mrb[0].mxu0
      %v602 = vadd.f32 0.0, %v601
      %603 = vmatprep.mubr.bf16.mxu0 0
      %604 = vmatmul.mubr.bf16.gmra.mrb[0].mxu0 %v419
      %v605 = vpop.f32.mrb[0].mxu0
      %v606 = vadd.f32 0.0, %v605
      %v607 = vpop.f32.mrb[0].mxu0
      %v608 = vadd.f32 0.0, %v607
      %v609 = vpop.f32.mrb[0].mxu0
      %v610 = vadd.f32 0.0, %v609
      %v611 = vpop.f32.mrb[0].mxu0
      %v612 = vadd.f32 0.0, %v611
      %613 = vdwg.mxu0
      %v614 = vmax.f32 %v456, 0.0
      %v615 = vmax.f32 %v458, 0.0
      %v616 = vmax.f32 %v460, 0.0
      %v617 = vmax.f32 %v462, 0.0
      %v618 = vmax.f32 %v466, 0.0
      %v619 = vmax.f32 %v468, 0.0
      %v620 = vmax.f32 %v470, 0.0
      %v621 = vmax.f32 %v472, 0.0
      %v622 = vmax.f32 %v476, 0.0
      %v623 = vmax.f32 %v478, 0.0
      %v624 = vmax.f32 %v480, 0.0
      %v625 = vmax.f32 %v482, 0.0
      %v626 = vmax.f32 %v486, 0.0
      %v627 = vmax.f32 %v488, 0.0
      %v628 = vmax.f32 %v490, 0.0
      %v629 = vmax.f32 %v492, 0.0
      %v630 = vmax.f32 %v496, 0.0
      %v631 = vmax.f32 %v498, 0.0
      %v632 = vmax.f32 %v500, 0.0
      %v633 = vmax.f32 %v502, 0.0
      %v634 = vmax.f32 %v506, 0.0
      %v635 = vmax.f32 %v508, 0.0
      %v636 = vmax.f32 %v510, 0.0
      %v637 = vmax.f32 %v512, 0.0
      %v638 = vmax.f32 %v516, 0.0
      %v639 = vmax.f32 %v518, 0.0
      %v640 = vmax.f32 %v520, 0.0
      %v641 = vmax.f32 %v522, 0.0
      %v642 = vmax.f32 %v526, 0.0
      %v643 = vmax.f32 %v528, 0.0
      %v644 = vmax.f32 %v530, 0.0
      %v645 = vmax.f32 %v532, 0.0
      %v646 = vmax.f32 %v536, 0.0
      %v647 = vmax.f32 %v538, 0.0
      %v648 = vmax.f32 %v540, 0.0
      %v649 = vmax.f32 %v542, 0.0
      %v650 = vmax.f32 %v546, 0.0
      %v651 = vmax.f32 %v548, 0.0
      %v652 = vmax.f32 %v550, 0.0
      %v653 = vmax.f32 %v552, 0.0
      %v654 = vmax.f32 %v556, 0.0
      %v655 = vmax.f32 %v558, 0.0
      %v656 = vmax.f32 %v560, 0.0
      %v657 = vmax.f32 %v562, 0.0
      %v658 = vmax.f32 %v566, 0.0
      %v659 = vmax.f32 %v568, 0.0
      %v660 = vmax.f32 %v570, 0.0
      %v661 = vmax.f32 %v572, 0.0
      %v662 = vmax.f32 %v576, 0.0
      %v663 = vmax.f32 %v578, 0.0
      %v664 = vmax.f32 %v580, 0.0
      %v665 = vmax.f32 %v582, 0.0
      %v666 = vmax.f32 %v586, 0.0
      %v667 = vmax.f32 %v588, 0.0
      %v668 = vmax.f32 %v590, 0.0
      %v669 = vmax.f32 %v592, 0.0
      %v670 = vmax.f32 %v596, 0.0
      %v671 = vmax.f32 %v598, 0.0
      %v672 = vmax.f32 %v600, 0.0
      %v673 = vmax.f32 %v602, 0.0
      %v674 = vmax.f32 %v606, 0.0
      %v675 = vmax.f32 %v608, 0.0
      %v676 = vmax.f32 %v610, 0.0
      %v677 = vmax.f32 %v612, 0.0
      %v678 = vpack.c.bf16 %v616, %v614
      %v679 = vpack.c.bf16 %v617, %v615
      %v680 = vpack.c.bf16 %v620, %v618
      %v681 = vpack.c.bf16 %v621, %v619
      %v682 = vpack.c.bf16 %v624, %v622
      %v683 = vpack.c.bf16 %v625, %v623
      %v684 = vpack.c.bf16 %v628, %v626
      %v685 = vpack.c.bf16 %v629, %v627
      %v686 = vpack.c.bf16 %v632, %v630
      %v687 = vpack.c.bf16 %v633, %v631
      %v688 = vpack.c.bf16 %v636, %v634
      %v689 = vpack.c.bf16 %v637, %v635
      %v690 = vpack.c.bf16 %v640, %v638
      %v691 = vpack.c.bf16 %v641, %v639
      %v692 = vpack.c.bf16 %v644, %v642
      %v693 = vpack.c.bf16 %v645, %v643
      %v694 = vpack.c.bf16 %v648, %v646
      %v695 = vpack.c.bf16 %v649, %v647
      %v696 = vpack.c.bf16 %v652, %v650
      %v697 = vpack.c.bf16 %v653, %v651
      %v698 = vpack.c.bf16 %v656, %v654
      %v699 = vpack.c.bf16 %v657, %v655
      %v700 = vpack.c.bf16 %v660, %v658
      %v701 = vpack.c.bf16 %v661, %v659
      %v702 = vpack.c.bf16 %v664, %v662
      %v703 = vpack.c.bf16 %v665, %v663
      %v704 = vpack.c.bf16 %v668, %v666
      %v705 = vpack.c.bf16 %v669, %v667
      %v706 = vpack.c.bf16 %v672, %v670
      %v707 = vpack.c.bf16 %v673, %v671
      %v708 = vpack.c.bf16 %v676, %v674
      %v709 = vpack.c.bf16 %v677, %v675
      %v710 = vld [vmem:[%s2] sm:$0xff]
      %v711 = vld [vmem:[%s2 + $0x8] sm:$0xff]
      %v712 = vld [vmem:[%s2 + $0x10] sm:$0xff]
      %v713 = vld [vmem:[%s2 + $0x18] sm:$0xff]
      %v714 = vld [vmem:[%s2 + $0x20] sm:$0xff]
      %v715 = vld [vmem:[%s2 + $0x28] sm:$0xff]
      %v716 = vld [vmem:[%s2 + $0x30] sm:$0xff]
      %v717 = vld [vmem:[%s2 + $0x38] sm:$0xff]
      %v718 = vld [vmem:[%s2 + $0x40] sm:$0xff]
      %v719 = vld [vmem:[%s2 + $0x48] sm:$0xff]
      %v720 = vld [vmem:[%s2 + $0x50] sm:$0xff]
      %v721 = vld [vmem:[%s2 + $0x58] sm:$0xff]
      %v722 = vld [vmem:[%s2 + $0x60] sm:$0xff]
      %v723 = vld [vmem:[%s2 + $0x68] sm:$0xff]
      %v724 = vld [vmem:[%s2 + $0x70] sm:$0xff]
      %v725 = vld [vmem:[%s2 + $0x78] sm:$0xff]
      %v742 = vunpack.c.l.b16 %v710
      %v743 = vunpack.c.h.b16 %v710
      %v744 = vunpack.c.l.b16 %v711
      %v745 = vunpack.c.h.b16 %v711
      %v746 = vunpack.c.l.b16 %v712
      %v747 = vunpack.c.h.b16 %v712
      %v748 = vunpack.c.l.b16 %v713
      %v749 = vunpack.c.h.b16 %v713
      %v750 = vunpack.c.l.b16 %v714
      %v751 = vunpack.c.h.b16 %v714
      %v752 = vunpack.c.l.b16 %v715
      %v753 = vunpack.c.h.b16 %v715
      %v754 = vunpack.c.l.b16 %v716
      %v755 = vunpack.c.h.b16 %v716
      %v756 = vunpack.c.l.b16 %v717
      %v757 = vunpack.c.h.b16 %v717
      %v758 = vunpack.c.l.b16 %v718
      %v759 = vunpack.c.h.b16 %v718
      %v760 = vunpack.c.l.b16 %v719
      %v761 = vunpack.c.h.b16 %v719
      %v762 = vunpack.c.l.b16 %v720
      %v763 = vunpack.c.h.b16 %v720
      %v764 = vunpack.c.l.b16 %v721
      %v765 = vunpack.c.h.b16 %v721
      %v766 = vunpack.c.l.b16 %v722
      %v767 = vunpack.c.h.b16 %v722
      %v768 = vunpack.c.l.b16 %v723
      %v769 = vunpack.c.h.b16 %v723
      %v770 = vunpack.c.l.b16 %v724
      %v771 = vunpack.c.h.b16 %v724
      %v772 = vunpack.c.l.b16 %v725
      %v773 = vunpack.c.h.b16 %v725
      %v774 = vpack.c.b16 %v744, %v742
      %v775 = vpack.c.b16 %v745, %v743
      %v776 = vpack.c.b16 %v748, %v746
      %v777 = vpack.c.b16 %v749, %v747
      %v778 = vpack.c.b16 %v752, %v750
      %v779 = vpack.c.b16 %v753, %v751
      %v780 = vpack.c.b16 %v756, %v754
      %v781 = vpack.c.b16 %v757, %v755
      %v782 = vpack.c.b16 %v760, %v758
      %v783 = vpack.c.b16 %v761, %v759
      %v784 = vpack.c.b16 %v764, %v762
      %v785 = vpack.c.b16 %v765, %v763
      %v786 = vpack.c.b16 %v768, %v766
      %v787 = vpack.c.b16 %v769, %v767
      %v788 = vpack.c.b16 %v772, %v770
      %v789 = vpack.c.b16 %v773, %v771
      %806 = vmatprep.subr.bf16.mxu0 %v679
      %807 = vmatpush1.bf16.msra.mxu0 %v678
      %808 = vmatprep.subr.bf16.mxu0 %v681
      %809 = vmatpush1.bf16.msra.mxu0 %v680
      %810 = vmatprep.subr.bf16.mxu0 %v683
      %811 = vmatpush1.bf16.msra.mxu0 %v682
      %812 = vmatprep.subr.bf16.mxu0 %v685
      %813 = vmatpush1.bf16.msra.mxu0 %v684
      %814 = vmatprep.subr.bf16.mxu0 %v687
      %815 = vmatpush1.bf16.msra.mxu0 %v686
      %816 = vmatprep.subr.bf16.mxu0 %v689
      %817 = vmatpush1.bf16.msra.mxu0 %v688
      %818 = vmatprep.subr.bf16.mxu0 %v691
      %819 = vmatpush1.bf16.msra.mxu0 %v690
      %820 = vmatprep.subr.bf16.mxu0 %v693
      %821 = vmatpush1.bf16.msra.mxu0 %v692
      %822 = vmatprep.subr.bf16.mxu0 %v695
      %823 = vmatpush1.bf16.msra.mxu0 %v694
      %824 = vmatprep.subr.bf16.mxu0 %v697
      %825 = vmatpush1.bf16.msra.mxu0 %v696
      %826 = vmatprep.subr.bf16.mxu0 %v699
      %827 = vmatpush1.bf16.msra.mxu0 %v698
      %828 = vmatprep.subr.bf16.mxu0 %v701
      %829 = vmatpush1.bf16.msra.mxu0 %v700
      %830 = vmatprep.subr.bf16.mxu0 %v703
      %831 = vmatpush1.bf16.msra.mxu0 %v702
      %832 = vmatprep.subr.bf16.mxu0 %v705
      %833 = vmatpush1.bf16.msra.mxu0 %v704
      %834 = vmatprep.subr.bf16.mxu0 %v707
      %835 = vmatpush1.bf16.msra.mxu0 %v706
      %836 = vmatprep.subr.bf16.mxu0 %v709
      %837 = vmatpush1.bf16.msra.mxu0 %v708
      %838 = vmatprep.mubr.bf16.mxu0 %v775
      %839 = vmatmul.mubr.bf16.gmra.mrb[0].mxu0 %v774
      %v840 = vpop.f32.mrb[0].mxu0
      %v841 = vadd.f32 0.0, %v840
      %v842 = vpop.f32.mrb[0].mxu0
      %v843 = vadd.f32 0.0, %v842
      %v844 = vpop.f32.mrb[0].mxu0
      %v845 = vadd.f32 0.0, %v844
      %v846 = vpop.f32.mrb[0].mxu0
      %v847 = vadd.f32 0.0, %v846
      %848 = vmatprep.mubr.bf16.mxu0 %v777
      %849 = vmatmul.mubr.bf16.gmra.mrb[0].mxu0 %v776
      %v850 = vpop.f32.mrb[0].mxu0
      %v851 = vadd.f32 0.0, %v850
      %v852 = vpop.f32.mrb[0].mxu0
      %v853 = vadd.f32 0.0, %v852
      %v854 = vpop.f32.mrb[0].mxu0
      %v855 = vadd.f32 0.0, %v854
      %v856 = vpop.f32.mrb[0].mxu0
      %v857 = vadd.f32 0.0, %v856
      %858 = vmatprep.mubr.bf16.mxu0 %v779
      %859 = vmatmul.mubr.bf16.gmra.mrb[0].mxu0 %v778
      %v860 = vpop.f32.mrb[0].mxu0
      %v861 = vadd.f32 0.0, %v860
      %v862 = vpop.f32.mrb[0].mxu0
      %v863 = vadd.f32 0.0, %v862
      %v864 = vpop.f32.mrb[0].mxu0
      %v865 = vadd.f32 0.0, %v864
      %v866 = vpop.f32.mrb[0].mxu0
      %v867 = vadd.f32 0.0, %v866
      %868 = vmatprep.mubr.bf16.mxu0 %v781
      %869 = vmatmul.mubr.bf16.gmra.mrb[0].mxu0 %v780
      %v870 = vpop.f32.mrb[0].mxu0
      %v871 = vadd.f32 0.0, %v870
      %v872 = vpop.f32.mrb[0].mxu0
      %v873 = vadd.f32 0.0, %v872
      %v874 = vpop.f32.mrb[0].mxu0
      %v875 = vadd.f32 0.0, %v874
      %v876 = vpop.f32.mrb[0].mxu0
      %v877 = vadd.f32 0.0, %v876
      %878 = vmatprep.mubr.bf16.mxu0 %v783
      %879 = vmatmul.mubr.bf16.gmra.mrb[0].mxu0 %v782
      %v880 = vpop.f32.mrb[0].mxu0
      %v881 = vadd.f32 0.0, %v880
      %v882 = vpop.f32.mrb[0].mxu0
      %v883 = vadd.f32 0.0, %v882
      %v884 = vpop.f32.mrb[0].mxu0
      %v885 = vadd.f32 0.0, %v884
      %v886 = vpop.f32.mrb[0].mxu0
      %v887 = vadd.f32 0.0, %v886
      %888 = vmatprep.mubr.bf16.mxu0 %v785
      %889 = vmatmul.mubr.bf16.gmra.mrb[0].mxu0 %v784
      %v890 = vpop.f32.mrb[0].mxu0
      %v891 = vadd.f32 0.0, %v890
      %v892 = vpop.f32.mrb[0].mxu0
      %v893 = vadd.f32 0.0, %v892
      %v894 = vpop.f32.mrb[0].mxu0
      %v895 = vadd.f32 0.0, %v894
      %v896 = vpop.f32.mrb[0].mxu0
      %v897 = vadd.f32 0.0, %v896
      %898 = vmatprep.mubr.bf16.mxu0 %v787
      %899 = vmatmul.mubr.bf16.gmra.mrb[0].mxu0 %v786
      %v900 = vpop.f32.mrb[0].mxu0
      %v901 = vadd.f32 0.0, %v900
      %v902 = vpop.f32.mrb[0].mxu0
      %v903 = vadd.f32 0.0, %v902
      %v904 = vpop.f32.mrb[0].mxu0
      %v905 = vadd.f32 0.0, %v904
      %v906 = vpop.f32.mrb[0].mxu0
      %v907 = vadd.f32 0.0, %v906
      %908 = vmatprep.mubr.bf16.mxu0 %v789
      %909 = vmatmul.mubr.bf16.gmra.mrb[0].mxu0 %v788
      %v910 = vpop.f32.mrb[0].mxu0
      %v911 = vadd.f32 0.0, %v910
      %v912 = vpop.f32.mrb[0].mxu0
      %v913 = vadd.f32 0.0, %v912
      %v914 = vpop.f32.mrb[0].mxu0
      %v915 = vadd.f32 0.0, %v914
      %v916 = vpop.f32.mrb[0].mxu0
      %v917 = vadd.f32 0.0, %v916
      %918 = vdwg.mxu0
      %v919 = vmax.f32 %v841, 0.0
      %v920 = vmax.f32 %v843, 0.0
      %v921 = vmax.f32 %v845, 0.0
      %v922 = vmax.f32 %v847, 0.0
      %v923 = vmax.f32 %v851, 0.0
      %v924 = vmax.f32 %v853, 0.0
      %v925 = vmax.f32 %v855, 0.0
      %v926 = vmax.f32 %v857, 0.0
      %v927 = vmax.f32 %v861, 0.0
      %v928 = vmax.f32 %v863, 0.0
      %v929 = vmax.f32 %v865, 0.0
      %v930 = vmax.f32 %v867, 0.0
      %v931 = vmax.f32 %v871, 0.0
      %v932 = vmax.f32 %v873, 0.0
      %v933 = vmax.f32 %v875, 0.0
      %v934 = vmax.f32 %v877, 0.0
      %v935 = vmax.f32 %v881, 0.0
      %v936 = vmax.f32 %v883, 0.0
      %v937 = vmax.f32 %v885, 0.0
      %v938 = vmax.f32 %v887, 0.0
      %v939 = vmax.f32 %v891, 0.0
      %v940 = vmax.f32 %v893, 0.0
      %v941 = vmax.f32 %v895, 0.0
      %v942 = vmax.f32 %v897, 0.0
      %v943 = vmax.f32 %v901, 0.0
      %v944 = vmax.f32 %v903, 0.0
      %v945 = vmax.f32 %v905, 0.0
      %v946 = vmax.f32 %v907, 0.0
      %v947 = vmax.f32 %v911, 0.0
      %v948 = vmax.f32 %v913, 0.0
      %v949 = vmax.f32 %v915, 0.0
      %v950 = vmax.f32 %v917, 0.0
      %v951 = vld [vmem:[%s3] sm:$0xff]
      %v952 = vld [vmem:[%s3 + $0x8] sm:$0xff]
      %v953 = vld [vmem:[%s3 + $0x10] sm:$0xff]
      %v954 = vld [vmem:[%s3 + $0x18] sm:$0xff]
      %v955 = vld [vmem:[%s3 + $0x20] sm:$0xff]
      %v956 = vld [vmem:[%s3 + $0x28] sm:$0xff]
      %v957 = vld [vmem:[%s3 + $0x30] sm:$0xff]
      %v958 = vld [vmem:[%s3 + $0x38] sm:$0xff]
      %v959 = vld [vmem:[%s3 + $0x40] sm:$0xff]
      %v960 = vld [vmem:[%s3 + $0x48] sm:$0xff]
      %v961 = vld [vmem:[%s3 + $0x50] sm:$0xff]
      %v962 = vld [vmem:[%s3 + $0x58] sm:$0xff]
      %v963 = vld [vmem:[%s3 + $0x60] sm:$0xff]
      %v964 = vld [vmem:[%s3 + $0x68] sm:$0xff]
      %v965 = vld [vmem:[%s3 + $0x70] sm:$0xff]
      %v966 = vld [vmem:[%s3 + $0x78] sm:$0xff]
      %968 = vset.pattern.permute.xlu0 0
      %969 = vperm.xlu0 %968, %v951
      %v970 = vpop.permute.xlu0 %969
      %973 = vset.pattern.permute.xlu0 0
      %974 = vperm.xlu0 %973, %v952
      %v975 = vpop.permute.xlu0 %974
      %978 = vset.pattern.permute.xlu0 0
      %979 = vperm.xlu0 %978, %v953
      %v980 = vpop.permute.xlu0 %979
      %983 = vset.pattern.permute.xlu0 0
      %984 = vperm.xlu0 %983, %v954
      %v985 = vpop.permute.xlu0 %984
      %988 = vset.pattern.permute.xlu0 0
      %989 = vperm.xlu0 %988, %v955
      %v990 = vpop.permute.xlu0 %989
      %993 = vset.pattern.permute.xlu0 0
      %994 = vperm.xlu0 %993, %v956
      %v995 = vpop.permute.xlu0 %994
      %998 = vset.pattern.permute.xlu0 0
      %999 = vperm.xlu0 %998, %v957
      %v1000 = vpop.permute.xlu0 %999
      %1003 = vset.pattern.permute.xlu0 0
      %1004 = vperm.xlu0 %1003, %v958
      %v1005 = vpop.permute.xlu0 %1004
      %1008 = vset.pattern.permute.xlu0 0
      %1009 = vperm.xlu0 %1008, %v959
      %v1010 = vpop.permute.xlu0 %1009
      %1013 = vset.pattern.permute.xlu0 0
      %1014 = vperm.xlu0 %1013, %v960
      %v1015 = vpop.permute.xlu0 %1014
      %1018 = vset.pattern.permute.xlu0 0
      %1019 = vperm.xlu0 %1018, %v961
      %v1020 = vpop.permute.xlu0 %1019
      %1023 = vset.pattern.permute.xlu0 0
      %1024 = vperm.xlu0 %1023, %v962
      %v1025 = vpop.permute.xlu0 %1024
      %1028 = vset.pattern.permute.xlu0 0
      %1029 = vperm.xlu0 %1028, %v963
      %v1030 = vpop.permute.xlu0 %1029
      %1033 = vset.pattern.permute.xlu0 0
      %1034 = vperm.xlu0 %1033, %v964
      %v1035 = vpop.permute.xlu0 %1034
      %1038 = vset.pattern.permute.xlu0 0
      %1039 = vperm.xlu0 %1038, %v965
      %v1040 = vpop.permute.xlu0 %1039
      %1043 = vset.pattern.permute.xlu0 0
      %1044 = vperm.xlu0 %1043, %v966
      %v1045 = vpop.permute.xlu0 %1044
      %v1047 = vmul.f32 %v970, %v919
      %v1048 = vmul.f32 %v970, %v920
      %v1049 = vmul.f32 %v975, %v921
      %v1050 = vmul.f32 %v975, %v922
      %v1051 = vmul.f32 %v980, %v923
      %v1052 = vmul.f32 %v980, %v924
      %v1053 = vmul.f32 %v985, %v925
      %v1054 = vmul.f32 %v985, %v926
      %v1055 = vmul.f32 %v990, %v927
      %v1056 = vmul.f32 %v990, %v928
      %v1057 = vmul.f32 %v995, %v929
      %v1058 = vmul.f32 %v995, %v930
      %v1059 = vmul.f32 %v1000, %v931
      %v1060 = vmul.f32 %v1000, %v932
      %v1061 = vmul.f32 %v1005, %v933
      %v1062 = vmul.f32 %v1005, %v934
      %v1063 = vmul.f32 %v1010, %v935
      %v1064 = vmul.f32 %v1010, %v936
      %v1065 = vmul.f32 %v1015, %v937
      %v1066 = vmul.f32 %v1015, %v938
      %v1067 = vmul.f32 %v1020, %v939
      %v1068 = vmul.f32 %v1020, %v940
      %v1069 = vmul.f32 %v1025, %v941
      %v1070 = vmul.f32 %v1025, %v942
      %v1071 = vmul.f32 %v1030, %v943
      %v1072 = vmul.f32 %v1030, %v944
      %v1073 = vmul.f32 %v1035, %v945
      %v1074 = vmul.f32 %v1035, %v946
      %v1075 = vmul.f32 %v1040, %v947
      %v1076 = vmul.f32 %v1040, %v948
      %v1077 = vmul.f32 %v1045, %v949
      %v1078 = vmul.f32 %v1045, %v950
      %v1079 = vadd.f32 %v1047, %v1049
      %v1080 = vadd.f32 %v1079, %v1051
      %v1081 = vadd.f32 %v1080, %v1053
      %v1082 = vadd.f32 %v1081, %v1055
      %v1083 = vadd.f32 %v1082, %v1057
      %v1084 = vadd.f32 %v1083, %v1059
      %v1085 = vadd.f32 %v1084, %v1061
      %v1086 = vadd.f32 %v1085, %v1063
      %v1087 = vadd.f32 %v1086, %v1065
      %v1088 = vadd.f32 %v1087, %v1067
      %v1089 = vadd.f32 %v1088, %v1069
      %v1090 = vadd.f32 %v1089, %v1071
      %v1091 = vadd.f32 %v1090, %v1073
      %v1092 = vadd.f32 %v1091, %v1075
      %v1093 = vadd.f32 %v1092, %v1077
      %v1094 = vrot.slane %v1093, 4
      %v1095 = vadd.f32 %v1093, %v1094
      %v1096 = vrot.slane %v1095, 2
      %v1097 = vadd.f32 %v1095, %v1096
      %v1098 = vrot.slane %v1097, 1
      %v1099 = vadd.f32 %v1097, %v1098
      %v1100 = vadd.f32 %v1048, %v1050
      %v1101 = vadd.f32 %v1100, %v1052
      %v1102 = vadd.f32 %v1101, %v1054
      %v1103 = vadd.f32 %v1102, %v1056
      %v1104 = vadd.f32 %v1103, %v1058
      %v1105 = vadd.f32 %v1104, %v1060
      %v1106 = vadd.f32 %v1105, %v1062
      %v1107 = vadd.f32 %v1106, %v1064
      %v1108 = vadd.f32 %v1107, %v1066
      %v1109 = vadd.f32 %v1108, %v1068
      %v1110 = vadd.f32 %v1109, %v1070
      %v1111 = vadd.f32 %v1110, %v1072
      %v1112 = vadd.f32 %v1111, %v1074
      %v1113 = vadd.f32 %v1112, %v1076
      %v1114 = vadd.f32 %v1113, %v1078
      %v1115 = vrot.slane %v1114, 4
      %v1116 = vadd.f32 %v1114, %v1115
      %v1117 = vrot.slane %v1116, 2
      %v1118 = vadd.f32 %v1116, %v1117
      %v1119 = vrot.slane %v1118, 1
      %v1120 = vadd.f32 %v1118, %v1119
      %v1121 = vxor.u32 %v1099, 2147483648
      %v1122 = vxor.u32 %v1120, 2147483648
      %v1123 = vmul.f32 %v1121, 1.442695
      %v1124 = vpow.pop %v1123
      %v1125 = vmul.f32 %v1122, 1.442695
      %v1126 = vpow.pop %v1125
      %v1127 = vadd.f32 %v1124, 1.0
      %v1128 = vadd.f32 %v1126, 1.0
      %v1129 = vrcp.pop %v1127
      %v1130 = vmul.f32 1.0, %v1129
      %v1131 = vrcp.pop %v1128
      %v1132 = vmul.f32 1.0, %v1131
      %v1135 = vcombine.low %v1130, %v1132
      %v1137 = vunpack.c.l.s4 1966171168
      %v1138 = vunpack.c.0.s8 %v1137
      %v1139 = vlaneseq
      %v1140 = vshrl.u32 %v1139, 7
      %v1141 = vsub.s32 %v1138, %v1140
      %v1142 = vrot.slane %v1135, %v1141
      %v1144 = vunpack.c.l.s4 1966171168
      %v1145 = vunpack.c.0.s8 %v1144
      %v1146 = vlaneseq
      %v1147 = vshrl.u32 %v1146, 7
      %v1148 = vsub.s32 %v1145, %v1147
      %v1149 = vrot.slane %v1142, %v1148
      %v1151 = vlaneseq
      %vm1152 = vcmp.ge.s32.totalorder %v1151, 0
      %vm1153 = vcmp.lt.s32.totalorder %v1151, 256
      %vm1154 = vmand %vm1152, %vm1153
      %1155 = vst.msk [vmem:[%s233] sm:$0x3] %vm1154, %v1149
      %s1156 = smul.u32 2, %s19
      %p1157 = scmp.lt.s32.totalorder %s20, 1
      %s1158 = scalar_select %p1157, %s20, 1
      %p1159 = scmp.lt.s32.totalorder %s1156, 1
      %s1160 = scalar_select %p1159, %s1156, 1
      %s1161 = smul.addr %s1158, 2
      %s1162 = sadd.s32 %s1160, %s1161
      %s1163 = scalar_lea.vmem %s4, %s1162
      // Predicated region
      $region37: #{local_domain_classifier.1} parent=35 // pred_check
        %p1164 = pneg %p138
      $region38: #{local_domain_classifier.1} parent=35 // pred_check_branch
        %1166 = sbr.rel (%p1164) target = $region40
      $region39: #{local_domain_classifier.1} parent=35 // pred_region
        %s1167 = smul.u32 2, %s19
      $region40: #{local_domain_classifier.1} parent=35 // pred_fallthru
        _
    $region36: #{local_domain_classifier.1} parent=5 // pred_fallthru
      _
    %p1168 = scmp.le.s32.totalorder 2, %s10
    // Predicated region
    $region41: #{local_domain_classifier.1} parent=5 // pred_check
      %p1169 = pneg %p1168
    $region42: #{local_domain_classifier.1} parent=5 // pred_check_branch
      %1171 = sbr.rel (%p1169) target = $region44
    $region43: #{local_domain_classifier.1} parent=5 // pred_region
      %s1172 = ssub.s32 %s10, 2
      // Predicated region
      $region45: #{local_domain_classifier.1} parent=43 // pred_check
        %p1173 = pneg %p144
      $region46: #{local_domain_classifier.1} parent=43 // pred_check_branch
        %1175 = sbr.rel (%p1173) target = $region48
      $region47: #{local_domain_classifier.1} parent=43 // pred_region
        %s1176 = smul.u32 2, %s21
        %p1177 = scmp.lt.s32.totalorder %s22, 1
        %s1178 = scalar_select %p1177, %s22, 1
        %p1179 = scmp.lt.s32.totalorder %s1176, 1
        %s1180 = scalar_select %p1179, %s1176, 1
        %s1181 = smul.addr %s1178, 2
        %s1182 = sadd.s32 %s1180, %s1181
        %s1183 = scalar_lea.vmem %s4, %s1182
      $region48: #{local_domain_classifier.1} parent=43 // pred_fallthru
        _
    $region44: #{local_domain_classifier.1} parent=5 // pred_fallthru
      _
  $region6: #{local_domain_classifier.1} parent=0 // loop_footer
    %s14 = sadd.s32 1, %s10
  $region7: #{local_domain_classifier.1} parent=0 // loop_footer_branch
    %9 = sbr.rel target = $region3
  $region8: #{local_domain_classifier.1} parent=0 // loop_exit
    _

</llo_original>
